<compile_context>
chip_gen: v6e
topology: v6e:2x2x1
jax: 0.10.0
libtpu: 0.0.40
codegen_flags: <defaults>
</compile_context>

<pallas_src>
import functools
import math

import jax
import jax.numpy as jnp
from jax.experimental import pallas as pl
from jax.experimental.pallas import tpu as pltpu


def attention_head_kernel(x_ref, w_qkv_ref, b_qkv_ref, o_ref, *,
                          hidden, inv_scale, mxu_dtype):
    # x_ref: (Bc, S, D) block — Bc batch elements per grid step (Bc == B when the grid
    # is collapsed to a single step on 1-TC chips; Bc == B // 2 on v7x megacore).
    x = x_ref[...]                                   # (Bc, S, D)
    bc, s, d = x.shape

    # Single fused projection for the whole block:
    #   (Bc*S, D) @ (D, 3D) + (1, 3D) -> (Bc*S, 3D), f32 accumulation on the MXU.
    xf = x.reshape(bc * s, d).astype(mxu_dtype)
    w = w_qkv_ref[...].astype(mxu_dtype)
    qkv = jnp.dot(xf, w, preferred_element_type=jnp.float32) + b_qkv_ref[...]
    qkv = qkv.reshape(bc, s, 3 * hidden)

    q = qkv[..., :hidden]                            # (Bc, S, D) f32
    k = qkv[..., hidden:2 * hidden]                  # (Bc, S, D) f32
    v = qkv[..., 2 * hidden:]                        # (Bc, S, D) f32

    # scores = (q @ k^T) / sqrt(S): contract the last axes directly (batched einsum) so
    # no explicit k.T is materialized.
    scores = jnp.einsum(
        "bqd,bkd->bqk",
        q.astype(mxu_dtype), k.astype(mxu_dtype),
        preferred_element_type=jnp.float32,
    ) * inv_scale                                    # (Bc, S, S) f32

    # Numerically stable softmax along the last axis.  Exact divide (not the approx EUP
    # reciprocal) — the approx path cost ~2e-3 of accuracy for no measurable win here.
    m = jnp.max(scores, axis=-1, keepdims=True)
    e = jnp.exp(scores - m)
    denom = jnp.sum(e, axis=-1, keepdims=True)
    p = e / denom                                    # (Bc, S, S)

    out = jnp.einsum(
        "bqk,bkd->bqd",
        p.astype(mxu_dtype), v.astype(mxu_dtype),
        preferred_element_type=jnp.float32,
    )                                                # (Bc, S, D)
    o_ref[...] = out.astype(o_ref.dtype)


def _default_batch_splits(batch):
    """Parallel grid steps along the batch axis.

    v7x has 2 TensorCores per chip, so a parallel batch axis of size 2 lets each core
    take half the batch.  v5e/v6e have a single TC where extra grid steps are pure
    per-step overhead at this problem size, so collapse to one step.  Detection is
    best-effort (device_kind string) with a safe single-step fallback.
    """
    try:
        kind = jax.devices()[0].device_kind.lower()
    except Exception:
        kind = ""
    n_cores = 2 if ("v7" in kind or "7x" in kind) else 1
    g = min(batch, n_cores)
    if g <= 0 or batch % g != 0:
        g = 1
    return g


def attention_head(x, wq, bq, wk, bk, wv, bv, *,
                   batch_splits=None, cast_mxu_to_bf16=False):
    """x: (B, S, D) float32. Weights (D, D) pre-transposed to (in, out); biases (1, D)."""
    B, S, D = x.shape
    inv_scale = 1.0 / (float(S) ** 0.5)              # matches torch: q.size(1) ** 0.5

    if batch_splits is None:
        batch_splits = _default_batch_splits(B)
    if batch_splits <= 0 or B % batch_splits != 0:
        batch_splits = 1
    bc = B // batch_splits                           # batch elements per grid step

    # Fuse the three projections into one weight/bias so the kernel does a single matmul.
    w_qkv = jnp.concatenate([wq, wk, wv], axis=1)    # (D, 3D)
    b_qkv = jnp.concatenate([bq, bk, bv], axis=1)    # (1, 3D)

    mxu_dtype = jnp.bfloat16 if cast_mxu_to_bf16 else x.dtype
    kernel = functools.partial(
        attention_head_kernel, hidden=D, inv_scale=inv_scale, mxu_dtype=mxu_dtype)

    return pl.pallas_call(
        kernel,
        out_shape=jax.ShapeDtypeStruct((B, S, D), x.dtype),
        grid_spec=pltpu.PrefetchScalarGridSpec(
            num_scalar_prefetch=0,
            grid=(batch_splits,),
            in_specs=[
                pl.BlockSpec((bc, S, D), lambda g: (g, 0, 0)),   # x: bc batch elems/step
                pl.BlockSpec((D, 3 * D), lambda g: (0, 0)),      # fused QKV weight (const)
                pl.BlockSpec((1, 3 * D), lambda g: (0, 0)),      # fused QKV bias (const)
            ],
            out_specs=pl.BlockSpec((bc, S, D), lambda g: (g, 0, 0)),
        ),
        compiler_params=pltpu.CompilerParams(
            # With batch_splits >= 2 (v7x path) both TensorCores take a batch slab each;
            # on 1-TC chips the single step makes this a no-op.
            dimension_semantics=("parallel",),
        ),
    )(x, w_qkv, b_qkv)


def _init_linear(key, size):
    """Deterministic init mimicking torch.nn.Linear default (uniform +-1/sqrt(in))."""
    kw, kb = jax.random.split(key)
    bound = 1.0 / math.sqrt(size)
    # Torch weight is (out, in); we store transposed (in, out) for x @ W.
    w = jax.random.uniform(kw, (size, size), jnp.float32, -bound, bound)
    b = jax.random.uniform(kb, (1, size), jnp.float32, -bound, bound)
    return w, b


def reference_attention_head(x, wq, bq, wk, bk, wv, bv):
    """Pure-JAX reference mirroring the PyTorch forward exactly."""
    q = x @ wq + bq
    k = x @ wk + bk
    v = x @ wv + bv
    scale = x.shape[1] ** 0.5
    scores = jnp.einsum("bqd,bkd->bqk", q, k) / scale
    scores = jax.nn.softmax(scores, axis=-1)
    return jnp.einsum("bqk,bkd->bqd", scores, v)


if __name__ == "__main__":
    B, S, D = 2, 8, 32  # batch=2, seq (patches)=8, hidden=32

    key = jax.random.PRNGKey(0)
    kx, kq, kk, kv = jax.random.split(key, 4)

    x = jax.random.normal(kx, (B, S, D), jnp.float32)
    wq, bq = _init_linear(kq, D)
    wk, bk = _init_linear(kk, D)
    wv, bv = _init_linear(kv, D)

    ref = reference_attention_head(x, wq, bq, wk, bk, wv, bv)

    # Default path (auto grid: single step on v5e/v6e, 2 parallel steps on v7x), f32 MXU.
    out = jax.block_until_ready(attention_head(x, wq, bq, wk, bk, wv, bv))
    assert out.shape == (B, S, D), out.shape
    err = float(jnp.max(jnp.abs(out - ref)))
    assert jnp.allclose(out, ref, atol=1e-4, rtol=1e-4), err

    # Explicitly exercise the 2-step (v7x megacore) path regardless of the chip we run on.
    out2 = jax.block_until_ready(
        attention_head(x, wq, bq, wk, bk, wv, bv, batch_splits=2))
    err2 = float(jnp.max(jnp.abs(out2 - ref)))
    assert jnp.allclose(out2, ref, atol=1e-4, rtol=1e-4), err2

    # Exercise the bf16-MXU-operand path (review suggestion) with a bounded tolerance.
    out_bf16 = jax.block_until_ready(
        attention_head(x, wq, bq, wk, bk, wv, bv, cast_mxu_to_bf16=True))
    err_bf16 = float(jnp.max(jnp.abs(out_bf16 - ref)))
    assert jnp.allclose(out_bf16, ref, atol=5e-2, rtol=5e-2), err_bf16

    print("KERNEL_OK")
</pallas_src>

<mosaic_0001>
module attributes {stable_mosaic.version = 11 : i64} {
  func.func @attention_head_kernel(%arg0: i32, %arg1: memref<2x8x32xf32, #tpu.memory_space<vmem>>, %arg2: memref<32x96xf32, #tpu.memory_space<vmem>>, %arg3: memref<1x96xf32, #tpu.memory_space<vmem>>, %arg4: memref<2x8x32xf32, #tpu.memory_space<vmem>>) attributes {dimension_semantics = [#tpu.dimension_semantics<parallel>], iteration_bounds = array<i64: 1>, scalar_prefetch = 0 : i64, scratch_operands = 0 : i64, tpu.core_type = #tpu.core_type<tc>, window_params = [{transform_indices = @transform_0, window_bounds = array<i64: 2, 8, 32>}, {pipeline_mode = #tpu.pipeline_mode<synchronous>, transform_indices = @transform_1, window_bounds = array<i64: 32, 96>}, {pipeline_mode = #tpu.pipeline_mode<synchronous>, transform_indices = @transform_2, window_bounds = array<i64: 1, 96>}, {transform_indices = @transform_3, window_bounds = array<i64: 2, 8, 32>}]} {
    %c0 = arith.constant 0 : index
    %c0_0 = arith.constant 0 : index
    %c0_1 = arith.constant 0 : index
    %0 = vector.load %arg1[%c0, %c0_0, %c0_1] : memref<2x8x32xf32, #tpu.memory_space<vmem>>, vector<2x8x32xf32>
    %1 = vector.shape_cast %0 : vector<2x8x32xf32> to vector<16x32xf32>
    %c0_2 = arith.constant 0 : index
    %c0_3 = arith.constant 0 : index
    %2 = vector.load %arg2[%c0_2, %c0_3] : memref<32x96xf32, #tpu.memory_space<vmem>>, vector<32x96xf32>
    %cst = arith.constant dense<0.000000e+00> : vector<16x96xf32>
    %3 = tpu.matmul %1, %2, %cst {dimension_numbers = #tpu.dot_dimension_numbers<[1], [0], [0], [1], [0, 0, 1, 1], [], []>} : vector<16x32xf32>, vector<32x96xf32>, vector<16x96xf32> -> vector<16x96xf32>
    %c0_4 = arith.constant 0 : index
    %c0_5 = arith.constant 0 : index
    %4 = vector.load %arg3[%c0_4, %c0_5] : memref<1x96xf32, #tpu.memory_space<vmem>>, vector<1x96xf32>
    %5 = vector.broadcast %4 : vector<1x96xf32> to vector<16x96xf32>
    %6 = arith.addf %3, %5 : vector<16x96xf32>
    %7 = vector.shape_cast %6 : vector<16x96xf32> to vector<2x8x96xf32>
    %8 = vector.extract_strided_slice %7 {offsets = [0, 0, 0], sizes = [2, 8, 32], strides = [1, 1, 1]} : vector<2x8x96xf32> to vector<2x8x32xf32>
    %9 = vector.extract_strided_slice %7 {offsets = [0, 0, 32], sizes = [2, 8, 32], strides = [1, 1, 1]} : vector<2x8x96xf32> to vector<2x8x32xf32>
    %10 = vector.extract_strided_slice %7 {offsets = [0, 0, 64], sizes = [2, 8, 32], strides = [1, 1, 1]} : vector<2x8x96xf32> to vector<2x8x32xf32>
    "tpu.trace_start"() <{level = 10 : i32, message = "bqd,bkd->bqk"}> : () -> ()
    %cst_6 = arith.constant dense<0.000000e+00> : vector<2x8x8xf32>
    %11 = tpu.matmul %8, %9, %cst_6 {dimension_numbers = #tpu.dot_dimension_numbers<[2], [2], [1], [1], [0, 0, 0, 1, 1, 1], [0], [0]>} : vector<2x8x32xf32>, vector<2x8x32xf32>, vector<2x8x8xf32> -> vector<2x8x8xf32>
    "tpu.trace_stop"() : () -> ()
    %cst_7 = arith.constant 0.353553385 : f32
    %12 = vector.broadcast %cst_7 : f32 to vector<2x8x8xf32>
    %13 = arith.mulf %11, %12 : vector<2x8x8xf32>
    %cst_8 = arith.constant dense<0xFF800000> : vector<2x8xf32>
    %14 = vector.multi_reduction <maximumf>, %13, %cst_8 [2] : vector<2x8x8xf32> to vector<2x8xf32>
    %15 = vector.shape_cast %14 : vector<2x8xf32> to vector<2x8x1xf32>
    %16 = vector.broadcast %15 : vector<2x8x1xf32> to vector<2x8x8xf32>
    %17 = arith.subf %13, %16 : vector<2x8x8xf32>
    %18 = math.exp %17 : vector<2x8x8xf32>
    %cst_9 = arith.constant dense<0.000000e+00> : vector<2x8xf32>
    %19 = vector.multi_reduction <add>, %18, %cst_9 [2] : vector<2x8x8xf32> to vector<2x8xf32>
    %20 = vector.shape_cast %19 : vector<2x8xf32> to vector<2x8x1xf32>
    %21 = vector.broadcast %20 : vector<2x8x1xf32> to vector<2x8x8xf32>
    %22 = arith.divf %18, %21 : vector<2x8x8xf32>
    "tpu.trace_start"() <{level = 10 : i32, message = "bqk,bkd->bqd"}> : () -> ()
    %cst_10 = arith.constant dense<0.000000e+00> : vector<2x8x32xf32>
    %23 = tpu.matmul %22, %10, %cst_10 {dimension_numbers = #tpu.dot_dimension_numbers<[2], [1], [1], [2], [0, 0, 0, 1, 1, 2], [0], [0]>} : vector<2x8x8xf32>, vector<2x8x32xf32>, vector<2x8x32xf32> -> vector<2x8x32xf32>
    "tpu.trace_stop"() : () -> ()
    %c0_11 = arith.constant 0 : index
    %c0_12 = arith.constant 0 : index
    %c0_13 = arith.constant 0 : index
    %24 = vector.load %arg4[%c0_11, %c0_12, %c0_13] : memref<2x8x32xf32, #tpu.memory_space<vmem>>, vector<2x8x32xf32>
    tpu.vector_store %arg4[%c0_11, %c0_12, %c0_13], %23 {strides = array<i32>} : memref<2x8x32xf32, #tpu.memory_space<vmem>>, vector<2x8x32xf32>,
    return
  }
  func.func @transform_0(%arg0: i32) -> (i32, i32, i32) {
    %c0_i32 = arith.constant 0 : i32
    %c0_i32_0 = arith.constant 0 : i32
    %c0_i32_1 = arith.constant 0 : i32
    return %arg0, %c0_i32, %c0_i32_0 : i32, i32, i32
  }
  func.func @transform_1(%arg0: i32) -> (i32, i32) {
    %c0_i32 = arith.constant 0 : i32
    %c0_i32_0 = arith.constant 0 : i32
    %c0_i32_1 = arith.constant 0 : i32
    return %c0_i32, %c0_i32_0 : i32, i32
  }
  func.func @transform_2(%arg0: i32) -> (i32, i32) {
    %c0_i32 = arith.constant 0 : i32
    %c0_i32_0 = arith.constant 0 : i32
    %c0_i32_1 = arith.constant 0 : i32
    return %c0_i32, %c0_i32_0 : i32, i32
  }
  func.func @transform_3(%arg0: i32) -> (i32, i32, i32) {
    %c0_i32 = arith.constant 0 : i32
    %c0_i32_0 = arith.constant 0 : i32
    %c0_i32_1 = arith.constant 0 : i32
    return %arg0, %c0_i32, %c0_i32_0 : i32, i32, i32
  }
}

</mosaic_0001>

<llo_original>
// kernel: tpu_custom_call.1
$region0: #{tpu_custom_call.1}
  #allocation0 [shape = 'u32[]', space=smem, size = 0x4, offset = 0x4, fixed_abs, tag = 'smem constant byte address 0x4 - core index']
  #allocation1 [shape = 'u32[144,128]{1,0:T(1,128)}', space=vmem, size = 0x12000, scoped, tag = 'internal scratch']
  %s0 = inlined_call_operand.hbm [shape: f32[2,8,32], index: 0, kind: input, shape index: {}]
  %s1 = inlined_call_operand.hbm [shape: f32[32,96], index: 1, kind: input, shape index: {}]
  %s2 = inlined_call_operand.vmem [shape: f32[1,96], index: 2, kind: input, shape index: {}]
  %s3 = inlined_call_operand.hbm [shape: f32[2,8,32], index: 3, kind: output, shape index: {}]
  %s4 = sld [smem:[#allocation0]]
  $region30: #{tpu_custom_call.1} parent=0
    _
  %s6 = ssub.s32 1, %s4
  %s7 = scalar_select 0, %s6, %s4
  $region1: #{tpu_custom_call.1} parent=0
    #allocation2 [shape = 'u8[8192]{0}', space=vmem, size = 0x2000, scoped, tag = 'input window, operand 0, single buffered']
    #allocation3 [shape = 's32[1]{0}', space=sflag, size = 0x4, scoped, tag = 'scoped memory for tpu_custom_call.1']
    #allocation4 [shape = 's32[1]{0}', space=sflag, size = 0x4, scoped, tag = 'scoped memory for tpu_custom_call.1']
    #allocation5 [shape = 'u8[16384]{0}', space=vmem, size = 0x4000, scoped, tag = 'input window, operand 1, single buffered']
    #allocation6 [shape = 's32[1]{0}', space=sflag, size = 0x4, scoped, tag = 'scoped memory for tpu_custom_call.1']
    #allocation7 [shape = 'u8[8192]{0}', space=vmem, size = 0x2000, scoped, tag = 'output window, operand 0, single buffered']
    %8 = vsyncpa [#allocation3], 0
    %9 = vsyncpa [#allocation6], 0
    %10 = vsyncpa [#allocation4], 0
    // Predicated region
    $region2: #{tpu_custom_call.1} parent=1 // pred_check
      _
    $region3: #{tpu_custom_call.1} parent=1 // pred_check_branch
      %12 = sbr.rel (0) target = $region5
    $region4: #{tpu_custom_call.1} parent=1 // pred_region
      %s14 = ssub.s32 256, 256
      %15 = vsyncadd [#allocation3], %s14
      %s16 = sshll.u32 [#allocation2], 4
      %s17 = int_to_ptr.vmem [resolvable:$true] %s16
      %22 = dma.hbm_to_vmem [thread:$0]  %s0, 256, %s17, [#allocation3], 128, 128, 8
    $region5: #{tpu_custom_call.1} parent=1 // pred_fallthru
      _
    // Predicated region
    $region6: #{tpu_custom_call.1} parent=1 // pred_check
      _
    $region7: #{tpu_custom_call.1} parent=1 // pred_check_branch
      %24 = sbr.rel (0) target = $region9
    $region8: #{tpu_custom_call.1} parent=1 // pred_region
      %s26 = ssub.s32 512, 512
      %27 = vsyncadd [#allocation6], %s26
      %s28 = sshll.u32 [#allocation5], 4
      %s29 = int_to_ptr.vmem [resolvable:$true] %s28
      %34 = dma.hbm_to_vmem [thread:$0]  %s1, 512, %s29, [#allocation6], 128, 128, 8
    $region9: #{tpu_custom_call.1} parent=1 // pred_fallthru
      _
    // Predicated region
    $region10: #{tpu_custom_call.1} parent=1 // pred_check
      _
    $region11: #{tpu_custom_call.1} parent=1 // pred_check_branch
      %36 = sbr.rel (0) target = $region13
    $region12: #{tpu_custom_call.1} parent=1 // pred_region
      _
    $region13: #{tpu_custom_call.1} parent=1 // pred_fallthru
      _
    // Predicated region
    $region14: #{tpu_custom_call.1} parent=1 // pred_check
      _
    $region15: #{tpu_custom_call.1} parent=1 // pred_check_branch
      %38 = sbr.rel (0) target = $region17
    $region16: #{tpu_custom_call.1} parent=1 // pred_region
      %39 = dma.done [#allocation3], 256
    $region17: #{tpu_custom_call.1} parent=1 // pred_fallthru
      _
    // Predicated region
    $region18: #{tpu_custom_call.1} parent=1 // pred_check
      _
    $region19: #{tpu_custom_call.1} parent=1 // pred_check_branch
      %41 = sbr.rel (0) target = $region21
    $region20: #{tpu_custom_call.1} parent=1 // pred_region
      %42 = dma.done [#allocation6], 512
    $region21: #{tpu_custom_call.1} parent=1 // pred_fallthru
      _
    %v43 = vld [vmem:[#allocation2] sm:$0xff]
    %v44 = vld [vmem:[#allocation2 + $0x8] sm:$0xff]
    %v45 = vld [vmem:[#allocation5] sm:$0xff]
    %v46 = vld [vmem:[#allocation5 + $0x8] sm:$0xff]
    %v47 = vld [vmem:[#allocation5 + $0x10] sm:$0xff]
    %v48 = vld [vmem:[#allocation5 + $0x18] sm:$0xff]
    %v49 = vld [vmem:[%s2] sm:$0x1]
    %v51 = vlaneseq
    %v52 = vshrl.u32 %v51, 7
    %v53 = vsub.s32 0, %v52
    %v54 = vrot.slane %v49, %v53
    %vm56 = vcmask 261120
    %v58 = vsel %vm56, %v43, 0
    %v61 = vsel %vm56, %v44, 0
    %63 = vmatprep.subr.mxu0 0.0
    %64 = vmatpush1.msra.mxu0 0.0
    %65 = vmatprep.subr.mxu0 0.0
    %66 = vmatpush1.msra.mxu0 0.0
    %67 = vmatprep.subr.mxu0 0.0
    %68 = vmatpush1.msra.mxu0 0.0
    %69 = vmatprep.subr.mxu0 0.0
    %70 = vmatpush1.msra.mxu0 0.0
    %71 = vmatprep.subr.mxu0 0.0
    %72 = vmatpush1.msra.mxu0 0.0
    %73 = vmatprep.subr.mxu0 0.0
    %74 = vmatpush1.msra.mxu0 0.0
    %75 = vmatprep.subr.mxu0 0.0
    %76 = vmatpush1.msra.mxu0 0.0
    %77 = vmatprep.subr.mxu0 0.0
    %78 = vmatpush1.msra.mxu0 0.0
    %79 = vmatprep.subr.mxu0 0.0
    %80 = vmatpush1.msra.mxu0 0.0
    %81 = vmatprep.subr.mxu0 0.0
    %82 = vmatpush1.msra.mxu0 0.0
    %83 = vmatprep.subr.mxu0 0.0
    %84 = vmatpush1.msra.mxu0 0.0
    %85 = vmatprep.subr.mxu0 0.0
    %86 = vmatpush1.msra.mxu0 0.0
    %87 = vmatprep.subr.mxu0 0.0
    %88 = vmatpush1.msra.mxu0 %v48
    %89 = vmatprep.subr.mxu0 0.0
    %90 = vmatpush1.msra.mxu0 %v47
    %91 = vmatprep.subr.mxu0 0.0
    %92 = vmatpush1.msra.mxu0 %v46
    %93 = vmatprep.subr.mxu0 0.0
    %94 = vmatpush1.msra.mxu0 %v45
    %95 = vmatprep.subr.mxu0 0.0
    %96 = vmatpush2.msra.mxu0 0.0
    %97 = vmatprep.subr.mxu0 0.0
    %98 = vmatpush2.msra.mxu0 0.0
    %99 = vmatprep.subr.mxu0 0.0
    %100 = vmatpush2.msra.mxu0 0.0
    %101 = vmatprep.subr.mxu0 0.0
    %102 = vmatpush2.msra.mxu0 0.0
    %103 = vmatprep.subr.mxu0 0.0
    %104 = vmatpush2.msra.mxu0 0.0
    %105 = vmatprep.subr.mxu0 0.0
    %106 = vmatpush2.msra.mxu0 0.0
    %107 = vmatprep.subr.mxu0 0.0
    %108 = vmatpush2.msra.mxu0 0.0
    %109 = vmatprep.subr.mxu0 0.0
    %110 = vmatpush2.msra.mxu0 0.0
    %111 = vmatprep.subr.mxu0 0.0
    %112 = vmatpush2.msra.mxu0 0.0
    %113 = vmatprep.subr.mxu0 0.0
    %114 = vmatpush2.msra.mxu0 0.0
    %115 = vmatprep.subr.mxu0 0.0
    %116 = vmatpush2.msra.mxu0 0.0
    %117 = vmatprep.subr.mxu0 0.0
    %118 = vmatpush2.msra.mxu0 0.0
    %119 = vmatprep.subr.mxu0 0.0
    %120 = vmatpush2.msra.mxu0 0.0
    %121 = vmatprep.subr.mxu0 0.0
    %122 = vmatpush2.msra.mxu0 0.0
    %123 = vmatprep.subr.mxu0 0.0
    %124 = vmatpush2.msra.mxu0 0.0
    %125 = vmatprep.subr.mxu0 0.0
    %126 = vmatpush2.msra.mxu0 0.0
    %127 = vmatprep.mubr.f32.mxu0 0.0
    %128 = vmatmul.mubr.f32.gmra.mxu0 %v58
    %v129 = vpop.f32.mrf.mxu0
    %v130 = vadd.f32 %v54, %v129
    %v131 = vpop.f32.mrf.mxu0
    %132 = vmatprep.mubr.f32.mxu0 0.0
    %133 = vmatmul.mubr.f32.gmra.mxu0 %v61
    %v134 = vpop.f32.mrf.mxu0
    %v135 = vadd.f32 %v54, %v134
    %v136 = vpop.f32.mrf.mxu0
    %137 = vdwg.mxu0
    %139 = vrot.lane.b32.xlu0 %v130, 96
    %v140 = vpop.permute.xlu0 %139
    %v141 = vsel %vm56, %v130, 0
    %v143 = vsel %vm56, %v140, 0
    %145 = vmatprep.subr.mxu0 0.0
    %146 = vmatpush1.xpose.msra.mxu0 0.0
    %147 = vmatprep.subr.mxu0 0.0
    %148 = vmatpush1.xpose.msra.mxu0 0.0
    %149 = vmatprep.subr.mxu0 0.0
    %150 = vmatpush1.xpose.msra.mxu0 0.0
    %151 = vmatprep.subr.mxu0 0.0
    %152 = vmatpush1.xpose.msra.mxu0 0.0
    %153 = vmatprep.subr.mxu0 0.0
    %154 = vmatpush1.xpose.msra.mxu0 0.0
    %155 = vmatprep.subr.mxu0 0.0
    %156 = vmatpush1.xpose.msra.mxu0 0.0
    %157 = vmatprep.subr.mxu0 0.0
    %158 = vmatpush1.xpose.msra.mxu0 0.0
    %159 = vmatprep.subr.mxu0 0.0
    %160 = vmatpush1.xpose.msra.mxu0 0.0
    %161 = vmatprep.subr.mxu0 0.0
    %162 = vmatpush1.xpose.msra.mxu0 0.0
    %163 = vmatprep.subr.mxu0 0.0
    %164 = vmatpush1.xpose.msra.mxu0 0.0
    %165 = vmatprep.subr.mxu0 0.0
    %166 = vmatpush1.xpose.msra.mxu0 0.0
    %167 = vmatprep.subr.mxu0 0.0
    %168 = vmatpush1.xpose.msra.mxu0 0.0
    %169 = vmatprep.subr.mxu0 0.0
    %170 = vmatpush1.xpose.msra.mxu0 0.0
    %171 = vmatprep.subr.mxu0 0.0
    %172 = vmatpush1.xpose.msra.mxu0 0.0
    %173 = vmatprep.subr.mxu0 0.0
    %174 = vmatpush1.xpose.msra.mxu0 0.0
    %175 = vmatprep.subr.mxu0 0.0
    %176 = vmatpush1.xpose.msra.mxu0 %v143
    %177 = vmatprep.subr.mxu0 0.0
    %178 = vmatpush2.xpose.msra.mxu0 0.0
    %179 = vmatprep.subr.mxu0 0.0
    %180 = vmatpush2.xpose.msra.mxu0 0.0
    %181 = vmatprep.subr.mxu0 0.0
    %182 = vmatpush2.xpose.msra.mxu0 0.0
    %183 = vmatprep.subr.mxu0 0.0
    %184 = vmatpush2.xpose.msra.mxu0 0.0
    %185 = vmatprep.subr.mxu0 0.0
    %186 = vmatpush2.xpose.msra.mxu0 0.0
    %187 = vmatprep.subr.mxu0 0.0
    %188 = vmatpush2.xpose.msra.mxu0 0.0
    %189 = vmatprep.subr.mxu0 0.0
    %190 = vmatpush2.xpose.msra.mxu0 0.0
    %191 = vmatprep.subr.mxu0 0.0
    %192 = vmatpush2.xpose.msra.mxu0 0.0
    %193 = vmatprep.subr.mxu0 0.0
    %194 = vmatpush2.xpose.msra.mxu0 0.0
    %195 = vmatprep.subr.mxu0 0.0
    %196 = vmatpush2.xpose.msra.mxu0 0.0
    %197 = vmatprep.subr.mxu0 0.0
    %198 = vmatpush2.xpose.msra.mxu0 0.0
    %199 = vmatprep.subr.mxu0 0.0
    %200 = vmatpush2.xpose.msra.mxu0 0.0
    %201 = vmatprep.subr.mxu0 0.0
    %202 = vmatpush2.xpose.msra.mxu0 0.0
    %203 = vmatprep.subr.mxu0 0.0
    %204 = vmatpush2.xpose.msra.mxu0 0.0
    %205 = vmatprep.subr.mxu0 0.0
    %206 = vmatpush2.xpose.msra.mxu0 0.0
    %207 = vmatprep.subr.mxu0 0.0
    %208 = vmatpush2.xpose.msra.mxu0 0.0
    %209 = vmatprep.mubr.f32.mxu0 0.0
    %210 = vmatmul.mubr.f32.gmra.mxu0 %v141
    %v211 = vpop.f32.mrf.mxu0
    %v212 = vadd.f32 0.0, %v211
    %v213 = vpop.f32.mrf.mxu0
    %214 = vdwg.mxu0
    %216 = vrot.lane.b32.xlu0 %v135, 96
    %v217 = vpop.permute.xlu0 %216
    %v218 = vsel %vm56, %v135, 0
    %v220 = vsel %vm56, %v217, 0
    %222 = vmatprep.subr.mxu0 0.0
    %223 = vmatpush1.xpose.msra.mxu0 0.0
    %224 = vmatprep.subr.mxu0 0.0
    %225 = vmatpush1.xpose.msra.mxu0 0.0
    %226 = vmatprep.subr.mxu0 0.0
    %227 = vmatpush1.xpose.msra.mxu0 0.0
    %228 = vmatprep.subr.mxu0 0.0
    %229 = vmatpush1.xpose.msra.mxu0 0.0
    %230 = vmatprep.subr.mxu0 0.0
    %231 = vmatpush1.xpose.msra.mxu0 0.0
    %232 = vmatprep.subr.mxu0 0.0
    %233 = vmatpush1.xpose.msra.mxu0 0.0
    %234 = vmatprep.subr.mxu0 0.0
    %235 = vmatpush1.xpose.msra.mxu0 0.0
    %236 = vmatprep.subr.mxu0 0.0
    %237 = vmatpush1.xpose.msra.mxu0 0.0
    %238 = vmatprep.subr.mxu0 0.0
    %239 = vmatpush1.xpose.msra.mxu0 0.0
    %240 = vmatprep.subr.mxu0 0.0
    %241 = vmatpush1.xpose.msra.mxu0 0.0
    %242 = vmatprep.subr.mxu0 0.0
    %243 = vmatpush1.xpose.msra.mxu0 0.0
    %244 = vmatprep.subr.mxu0 0.0
    %245 = vmatpush1.xpose.msra.mxu0 0.0
    %246 = vmatprep.subr.mxu0 0.0
    %247 = vmatpush1.xpose.msra.mxu0 0.0
    %248 = vmatprep.subr.mxu0 0.0
    %249 = vmatpush1.xpose.msra.mxu0 0.0
    %250 = vmatprep.subr.mxu0 0.0
    %251 = vmatpush1.xpose.msra.mxu0 0.0
    %252 = vmatprep.subr.mxu0 0.0
    %253 = vmatpush1.xpose.msra.mxu0 %v220
    %254 = vmatprep.subr.mxu0 0.0
    %255 = vmatpush2.xpose.msra.mxu0 0.0
    %256 = vmatprep.subr.mxu0 0.0
    %257 = vmatpush2.xpose.msra.mxu0 0.0
    %258 = vmatprep.subr.mxu0 0.0
    %259 = vmatpush2.xpose.msra.mxu0 0.0
    %260 = vmatprep.subr.mxu0 0.0
    %261 = vmatpush2.xpose.msra.mxu0 0.0
    %262 = vmatprep.subr.mxu0 0.0
    %263 = vmatpush2.xpose.msra.mxu0 0.0
    %264 = vmatprep.subr.mxu0 0.0
    %265 = vmatpush2.xpose.msra.mxu0 0.0
    %266 = vmatprep.subr.mxu0 0.0
    %267 = vmatpush2.xpose.msra.mxu0 0.0
    %268 = vmatprep.subr.mxu0 0.0
    %269 = vmatpush2.xpose.msra.mxu0 0.0
    %270 = vmatprep.subr.mxu0 0.0
    %271 = vmatpush2.xpose.msra.mxu0 0.0
    %272 = vmatprep.subr.mxu0 0.0
    %273 = vmatpush2.xpose.msra.mxu0 0.0
    %274 = vmatprep.subr.mxu0 0.0
    %275 = vmatpush2.xpose.msra.mxu0 0.0
    %276 = vmatprep.subr.mxu0 0.0
    %277 = vmatpush2.xpose.msra.mxu0 0.0
    %278 = vmatprep.subr.mxu0 0.0
    %279 = vmatpush2.xpose.msra.mxu0 0.0
    %280 = vmatprep.subr.mxu0 0.0
    %281 = vmatpush2.xpose.msra.mxu0 0.0
    %282 = vmatprep.subr.mxu0 0.0
    %283 = vmatpush2.xpose.msra.mxu0 0.0
    %284 = vmatprep.subr.mxu0 0.0
    %285 = vmatpush2.xpose.msra.mxu0 0.0
    %286 = vmatprep.mubr.f32.mxu0 0.0
    %287 = vmatmul.mubr.f32.gmra.mxu0 %v218
    %v288 = vpop.f32.mrf.mxu0
    %v289 = vadd.f32 0.0, %v288
    %v290 = vpop.f32.mrf.mxu0
    %291 = vdwg.mxu0
    %v292 = vmul.f32 %v212, 0.35355338
    %v293 = vmul.f32 %v289, 0.35355338
    %vm294 = vcmask 64512
    %v295 = vsel %vm294, %v292, -inf
    %296 = vmax.xlane.f32.xlu0 %v295
    %v297 = vpop.xlane.xlu0 %296
    %v298 = vsel %vm294, %v293, -inf
    %299 = vmax.xlane.f32.xlu0 %v298
    %v300 = vpop.xlane.xlu0 %299
    %v301 = vsub.f32 %v292, %v297
    %v302 = vsub.f32 %v293, %v300
    %v303 = vmul.f32 %v301, 1.442695
    %v304 = vpow.pop %v303
    %v305 = vmul.f32 %v302, 1.442695
    %v306 = vpow.pop %v305
    %v307 = vsel %vm294, %v304, 0.0
    %308 = vadd.xlane.f32.xlu0 %v307
    %v309 = vpop.xlane.xlu0 %308
    %v310 = vsel %vm294, %v306, 0.0
    %311 = vadd.xlane.f32.xlu0 %v310
    %v312 = vpop.xlane.xlu0 %311
    %v313 = vrcp.pop %v309
    %v314 = vmul.f32 %v304, %v313
    %v315 = vrcp.pop %v312
    %v316 = vmul.f32 %v306, %v315
    %317 = vrot.lane.b32.xlu0 %v130, 64
    %v318 = vpop.permute.xlu0 %317
    %v321 = vsel %vm294, %v314, 0
    %323 = vmatprep.subr.mxu0 0.0
    %324 = vmatpush1.msra.mxu0 0.0
    %325 = vmatprep.subr.mxu0 0.0
    %326 = vmatpush1.msra.mxu0 0.0
    %327 = vmatprep.subr.mxu0 0.0
    %328 = vmatpush1.msra.mxu0 0.0
    %329 = vmatprep.subr.mxu0 0.0
    %330 = vmatpush1.msra.mxu0 0.0
    %331 = vmatprep.subr.mxu0 0.0
    %332 = vmatpush1.msra.mxu0 0.0
    %333 = vmatprep.subr.mxu0 0.0
    %334 = vmatpush1.msra.mxu0 0.0
    %335 = vmatprep.subr.mxu0 0.0
    %336 = vmatpush1.msra.mxu0 0.0
    %337 = vmatprep.subr.mxu0 0.0
    %338 = vmatpush1.msra.mxu0 0.0
    %339 = vmatprep.subr.mxu0 0.0
    %340 = vmatpush1.msra.mxu0 0.0
    %341 = vmatprep.subr.mxu0 0.0
    %342 = vmatpush1.msra.mxu0 0.0
    %343 = vmatprep.subr.mxu0 0.0
    %344 = vmatpush1.msra.mxu0 0.0
    %345 = vmatprep.subr.mxu0 0.0
    %346 = vmatpush1.msra.mxu0 0.0
    %347 = vmatprep.subr.mxu0 0.0
    %348 = vmatpush1.msra.mxu0 0.0
    %349 = vmatprep.subr.mxu0 0.0
    %350 = vmatpush1.msra.mxu0 0.0
    %351 = vmatprep.subr.mxu0 0.0
    %352 = vmatpush1.msra.mxu0 0.0
    %353 = vmatprep.subr.mxu0 0.0
    %354 = vmatpush1.msra.mxu0 %v318
    %355 = vmatprep.subr.mxu0 0.0
    %356 = vmatpush2.msra.mxu0 0.0
    %357 = vmatprep.subr.mxu0 0.0
    %358 = vmatpush2.msra.mxu0 0.0
    %359 = vmatprep.subr.mxu0 0.0
    %360 = vmatpush2.msra.mxu0 0.0
    %361 = vmatprep.subr.mxu0 0.0
    %362 = vmatpush2.msra.mxu0 0.0
    %363 = vmatprep.subr.mxu0 0.0
    %364 = vmatpush2.msra.mxu0 0.0
    %365 = vmatprep.subr.mxu0 0.0
    %366 = vmatpush2.msra.mxu0 0.0
    %367 = vmatprep.subr.mxu0 0.0
    %368 = vmatpush2.msra.mxu0 0.0
    %369 = vmatprep.subr.mxu0 0.0
    %370 = vmatpush2.msra.mxu0 0.0
    %371 = vmatprep.subr.mxu0 0.0
    %372 = vmatpush2.msra.mxu0 0.0
    %373 = vmatprep.subr.mxu0 0.0
    %374 = vmatpush2.msra.mxu0 0.0
    %375 = vmatprep.subr.mxu0 0.0
    %376 = vmatpush2.msra.mxu0 0.0
    %377 = vmatprep.subr.mxu0 0.0
    %378 = vmatpush2.msra.mxu0 0.0
    %379 = vmatprep.subr.mxu0 0.0
    %380 = vmatpush2.msra.mxu0 0.0
    %381 = vmatprep.subr.mxu0 0.0
    %382 = vmatpush2.msra.mxu0 0.0
    %383 = vmatprep.subr.mxu0 0.0
    %384 = vmatpush2.msra.mxu0 0.0
    %385 = vmatprep.subr.mxu0 0.0
    %386 = vmatpush2.msra.mxu0 0.0
    %387 = vmatprep.mubr.f32.mxu0 0.0
    %388 = vmatmul.mubr.f32.gmra.mxu0 %v321
    %v389 = vpop.f32.mrf.mxu0
    %v390 = vadd.f32 0.0, %v389
    %v391 = vpop.f32.mrf.mxu0
    %392 = vdwg.mxu0
    %393 = vrot.lane.b32.xlu0 %v135, 64
    %v394 = vpop.permute.xlu0 %393
    %v397 = vsel %vm294, %v316, 0
    %399 = vmatprep.subr.mxu0 0.0
    %400 = vmatpush1.msra.mxu0 0.0
    %401 = vmatprep.subr.mxu0 0.0
    %402 = vmatpush1.msra.mxu0 0.0
    %403 = vmatprep.subr.mxu0 0.0
    %404 = vmatpush1.msra.mxu0 0.0
    %405 = vmatprep.subr.mxu0 0.0
    %406 = vmatpush1.msra.mxu0 0.0
    %407 = vmatprep.subr.mxu0 0.0
    %408 = vmatpush1.msra.mxu0 0.0
    %409 = vmatprep.subr.mxu0 0.0
    %410 = vmatpush1.msra.mxu0 0.0
    %411 = vmatprep.subr.mxu0 0.0
    %412 = vmatpush1.msra.mxu0 0.0
    %413 = vmatprep.subr.mxu0 0.0
    %414 = vmatpush1.msra.mxu0 0.0
    %415 = vmatprep.subr.mxu0 0.0
    %416 = vmatpush1.msra.mxu0 0.0
    %417 = vmatprep.subr.mxu0 0.0
    %418 = vmatpush1.msra.mxu0 0.0
    %419 = vmatprep.subr.mxu0 0.0
    %420 = vmatpush1.msra.mxu0 0.0
    %421 = vmatprep.subr.mxu0 0.0
    %422 = vmatpush1.msra.mxu0 0.0
    %423 = vmatprep.subr.mxu0 0.0
    %424 = vmatpush1.msra.mxu0 0.0
    %425 = vmatprep.subr.mxu0 0.0
    %426 = vmatpush1.msra.mxu0 0.0
    %427 = vmatprep.subr.mxu0 0.0
    %428 = vmatpush1.msra.mxu0 0.0
    %429 = vmatprep.subr.mxu0 0.0
    %430 = vmatpush1.msra.mxu0 %v394
    %431 = vmatprep.subr.mxu0 0.0
    %432 = vmatpush2.msra.mxu0 0.0
    %433 = vmatprep.subr.mxu0 0.0
    %434 = vmatpush2.msra.mxu0 0.0
    %435 = vmatprep.subr.mxu0 0.0
    %436 = vmatpush2.msra.mxu0 0.0
    %437 = vmatprep.subr.mxu0 0.0
    %438 = vmatpush2.msra.mxu0 0.0
    %439 = vmatprep.subr.mxu0 0.0
    %440 = vmatpush2.msra.mxu0 0.0
    %441 = vmatprep.subr.mxu0 0.0
    %442 = vmatpush2.msra.mxu0 0.0
    %443 = vmatprep.subr.mxu0 0.0
    %444 = vmatpush2.msra.mxu0 0.0
    %445 = vmatprep.subr.mxu0 0.0
    %446 = vmatpush2.msra.mxu0 0.0
    %447 = vmatprep.subr.mxu0 0.0
    %448 = vmatpush2.msra.mxu0 0.0
    %449 = vmatprep.subr.mxu0 0.0
    %450 = vmatpush2.msra.mxu0 0.0
    %451 = vmatprep.subr.mxu0 0.0
    %452 = vmatpush2.msra.mxu0 0.0
    %453 = vmatprep.subr.mxu0 0.0
    %454 = vmatpush2.msra.mxu0 0.0
    %455 = vmatprep.subr.mxu0 0.0
    %456 = vmatpush2.msra.mxu0 0.0
    %457 = vmatprep.subr.mxu0 0.0
    %458 = vmatpush2.msra.mxu0 0.0
    %459 = vmatprep.subr.mxu0 0.0
    %460 = vmatpush2.msra.mxu0 0.0
    %461 = vmatprep.subr.mxu0 0.0
    %462 = vmatpush2.msra.mxu0 0.0
    %463 = vmatprep.mubr.f32.mxu0 0.0
    %464 = vmatmul.mubr.f32.gmra.mxu0 %v397
    %v465 = vpop.f32.mrf.mxu0
    %v466 = vadd.f32 0.0, %v465
    %v467 = vpop.f32.mrf.mxu0
    %468 = vdwg.mxu0
    %469 = vst.msk [vmem:[#allocation7] sm:$0xff] %vm56, %v390
    %470 = vst.msk [vmem:[#allocation7 + $0x8] sm:$0xff] %vm56, %v466
    // Predicated region
    $region22: #{tpu_custom_call.1} parent=1 // pred_check
      _
    $region23: #{tpu_custom_call.1} parent=1 // pred_check_branch
      %472 = sbr.rel (0) target = $region25
    $region24: #{tpu_custom_call.1} parent=1 // pred_region
      %s474 = ssub.s32 256, 256
      %475 = vsyncadd [#allocation4], %s474
      %s476 = sshll.u32 [#allocation7], 4
      %s477 = int_to_ptr.vmem [resolvable:$true] %s476
      %482 = dma.vmem_to_hbm [thread:$0]  %s477, 256, %s3, [#allocation4], 128, 128, 8
    $region25: #{tpu_custom_call.1} parent=1 // pred_fallthru
      _
    // Predicated region
    $region26: #{tpu_custom_call.1} parent=1 // pred_check
      _
    $region27: #{tpu_custom_call.1} parent=1 // pred_check_branch
      %484 = sbr.rel (0) target = $region29
    $region28: #{tpu_custom_call.1} parent=1 // pred_region
      %485 = dma.done [#allocation4], 256
    $region29: #{tpu_custom_call.1} parent=1 // pred_fallthru
      _
    %486 = vsyncpa [#allocation3], 1
    %487 = vsyncpa [#allocation6], 1
    %488 = vsyncpa [#allocation4], 1

</llo_original>
